<compile_context>
chip_gen: v6e
topology: v6e:2x2x1
jax: 0.10.0
libtpu: 0.0.40
codegen_flags: <defaults>
</compile_context>

<pallas_src>
import functools

import jax
import jax.numpy as jnp
from jax.experimental import pallas as pl
from jax.experimental.pallas import tpu as pltpu


# --------------------------------- kernels ----------------------------------


def _se_gate_kernel(w_ref, x_ref, o_ref, *, inv_hw):
    """Fused single-pass path: one row tile, full h*w in the lane dim.

    w_ref : SMEM scalar-prefetch ref, shape (2,) f32 -> [w1, w2] (1x1 conv weights)
    x_ref : VMEM tile (row_tile, hw), input dtype
    o_ref : VMEM tile (row_tile, hw), input dtype
    """
    x = x_ref[...]
    # AdaptiveAvgPool over the spatial (h*w) axis; accumulate in f32.  The last
    # block dim equals the full h*w, so no padded lanes enter the sum.
    s = jnp.sum(x, axis=-1, keepdims=True, dtype=jnp.float32)      # (row_tile, 1)
    m = s * inv_hw
    # conv1 (1x1, no bias) -> ReLU -> conv2 (1x1, no bias) -> sigmoid, then -0.5
    y = jax.nn.sigmoid(w_ref[1] * jnp.maximum(w_ref[0] * m, 0.0)) - 0.5
    # out = x + x*y == x*(1+y); do the multiply in f32, cast once at the store.
    o_ref[...] = (x.astype(jnp.float32) * (1.0 + y)).astype(o_ref.dtype)


def _row_sum_kernel(x_ref, sums_ref, *, hw, hw_tile):
    """Fallback pass 1: per-row f32 sums, accumulated across h*w tiles."""
    k = pl.program_id(1)

    @pl.when(k == 0)
    def _():
        sums_ref[...] = jnp.zeros_like(sums_ref)

    x = x_ref[...].astype(jnp.float32)
    # Mask lanes past the true h*w in the (possibly partial) last block so the
    # sum stays exact.
    lane = jax.lax.broadcasted_iota(jnp.int32, x.shape, 1) + k * hw_tile
    x = jnp.where(lane < hw, x, 0.0)
    sums_ref[...] += jnp.sum(x, axis=-1, keepdims=True)


def _apply_gate_kernel(w_ref, sums_ref, x_ref, o_ref, *, inv_hw):
    """Fallback pass 2: recompute the per-row gate from the sums and apply it."""
    m = sums_ref[...] * inv_hw                                      # (row_tile, 1)
    y = jax.nn.sigmoid(w_ref[1] * jnp.maximum(w_ref[0] * m, 0.0)) - 0.5
    o_ref[...] = (x_ref[...].astype(jnp.float32) * (1.0 + y)).astype(o_ref.dtype)


# --------------------------------- wrapper ----------------------------------


def _chip_config():
    """Returns (vmem_limit_bytes, target_tile_bytes, min_grid_steps)."""
    vmem_cap = None
    try:
        info = pltpu.get_tpu_info()
        vmem_cap = int(getattr(info, "vmem_capacity_bytes", 0)) or None
    except Exception:
        vmem_cap = None
    if vmem_cap is not None and vmem_cap > 100 * 1024 * 1024:
        # 128 MiB VMEM, single TensorCore (v5e / v6e): bigger tiles, no forced
        # extra grid steps.
        return 64 * 1024 * 1024, 8 * 1024 * 1024, 1
    # 64 MiB VMEM / 2 TensorCores (v7x) -- and the conservative default when
    # the query fails: smaller tiles, >=2 steps per core so both TCs pipeline.
    return 32 * 1024 * 1024, 4 * 1024 * 1024, 4


@functools.partial(jax.jit, static_argnames=("tile_bytes_override",))
def layer_tam_se_forward(x, conv1_w, conv2_w, *, tile_bytes_override=None):
    """x: (b, c, t, h, w); conv{1,2}_w: weights of the 1x1 Conv2d(1,1) layers."""
    b, c, t, h, w = x.shape
    rows = b * c * t
    hw = h * w
    dtype = x.dtype
    itemsize = jnp.dtype(dtype).itemsize
    sublane = max(8, 32 // itemsize)          # 8 for f32, 16 for bf16
    inv_hw = float(1.0 / hw)
    f32_bytes = 4                              # budget tiles by f32 footprint so
                                               # in-kernel f32 intermediates fit

    vmem_limit, tile_bytes, min_steps = _chip_config()
    if tile_bytes_override is not None:
        tile_bytes = int(tile_bytes_override)

    x2d = x.reshape(rows, hw)                  # contiguous reshape -> free
    w_vec = jnp.stack([conv1_w.reshape(()), conv2_w.reshape(())]).astype(jnp.float32)

    # Degenerate tiny-row guard (rows < one sublane) keeps every block legal.
    pad_rows = sublane - rows if rows < sublane else 0
    if pad_rows:
        x2d = jnp.pad(x2d, ((0, pad_rows), (0, 0)))
    rows_p = rows + pad_rows

    fused_ok = (sublane * hw * f32_bytes <= tile_bytes) or (hw < 2 * 128)

    if fused_ok:
        # -------------------- fused single-pass path (common case) ----------
        budget_rows = max(sublane,
                          (tile_bytes // (hw * f32_bytes)) // sublane * sublane)
        row_tile = min(budget_rows, max(sublane, (rows_p // sublane) * sublane))
        if min_steps > 1 and rows_p >= min_steps * sublane:
            per_step = max(sublane, (rows_p // min_steps) // sublane * sublane)
            row_tile = min(row_tile, per_step)
        num_steps = pl.cdiv(rows_p, row_tile)

        out2d = pl.pallas_call(
            functools.partial(_se_gate_kernel, inv_hw=inv_hw),
            out_shape=jax.ShapeDtypeStruct((rows_p, hw), dtype),
            grid_spec=pltpu.PrefetchScalarGridSpec(
                num_scalar_prefetch=1,
                grid=(num_steps,),
                in_specs=[pl.BlockSpec((row_tile, hw), lambda i, w_s: (i, 0))],
                out_specs=pl.BlockSpec((row_tile, hw), lambda i, w_s: (i, 0)),
            ),
            compiler_params=pltpu.CompilerParams(
                dimension_semantics=("parallel",),
                vmem_limit_bytes=vmem_limit,
            ),
            cost_estimate=pl.CostEstimate(
                flops=3 * rows * hw,
                transcendentals=rows,
                bytes_accessed=2 * rows * hw * itemsize,
            ),
        )(w_vec, x2d)
    else:
        # -------------------- large-h*w two-pass fallback --------------------
        hw_tile = min((hw // 128) * 128,
                      max(128, (tile_bytes // (sublane * f32_bytes)) // 128 * 128))
        row_tile = max(sublane,
                       (tile_bytes // (hw_tile * f32_bytes)) // sublane * sublane)
        row_tile = min(row_tile, max(sublane, (rows_p // sublane) * sublane))
        row_steps = pl.cdiv(rows_p, row_tile)
        hw_steps = pl.cdiv(hw, hw_tile)

        sums = pl.pallas_call(
            functools.partial(_row_sum_kernel, hw=hw, hw_tile=hw_tile),
            out_shape=jax.ShapeDtypeStruct((rows_p, 1), jnp.float32),
            grid_spec=pltpu.PrefetchScalarGridSpec(
                num_scalar_prefetch=0,
                grid=(row_steps, hw_steps),
                in_specs=[pl.BlockSpec((row_tile, hw_tile), lambda i, k: (i, k))],
                out_specs=pl.BlockSpec((row_tile, 1), lambda i, k: (i, 0)),
            ),
            compiler_params=pltpu.CompilerParams(
                dimension_semantics=("parallel", "arbitrary"),
                vmem_limit_bytes=vmem_limit,
            ),
            cost_estimate=pl.CostEstimate(
                flops=rows * hw,
                transcendentals=0,
                bytes_accessed=rows * hw * itemsize,
            ),
        )(x2d)

        out2d = pl.pallas_call(
            functools.partial(_apply_gate_kernel, inv_hw=inv_hw),
            out_shape=jax.ShapeDtypeStruct((rows_p, hw), dtype),
            grid_spec=pltpu.PrefetchScalarGridSpec(
                num_scalar_prefetch=1,
                grid=(row_steps, hw_steps),
                in_specs=[
                    pl.BlockSpec((row_tile, 1), lambda i, k, w_s: (i, 0)),
                    pl.BlockSpec((row_tile, hw_tile), lambda i, k, w_s: (i, k)),
                ],
                out_specs=pl.BlockSpec((row_tile, hw_tile), lambda i, k, w_s: (i, k)),
            ),
            compiler_params=pltpu.CompilerParams(
                dimension_semantics=("parallel", "parallel"),
                vmem_limit_bytes=vmem_limit,
            ),
            cost_estimate=pl.CostEstimate(
                flops=2 * rows * hw,
                transcendentals=rows,
                bytes_accessed=2 * rows * hw * itemsize,
            ),
        )(w_vec, sums, x2d)

    if pad_rows:
        out2d = out2d[:rows]
    return out2d.reshape(b, c, t, h, w)


def _reference(x, w1, w2):
    """Pure-JAX reference matching the PyTorch forward."""
    xf = x.astype(jnp.float32)
    m = jnp.mean(xf, axis=(-2, -1), keepdims=True)                  # (b,c,t,1,1)
    y = jax.nn.sigmoid(w2 * jax.nn.relu(w1 * m)) - 0.5
    return (xf + xf * y).astype(x.dtype)


if __name__ == "__main__":
    key = jax.random.PRNGKey(0)
    kx, k1, k2, kx2, kx3, kx4 = jax.random.split(key, 6)

    # Conv2d(1, 1, kernel_size=1, bias=False) weights: shape (1,1,1,1) -> scalars.
    conv1_w = jax.random.normal(k1, (1, 1, 1, 1), dtype=jnp.float32)
    conv2_w = jax.random.normal(k2, (1, 1, 1, 1), dtype=jnp.float32)
    w1 = conv1_w.reshape(())
    w2 = conv2_w.reshape(())

    # Case 1: lane-dense shape (h*w = 256), f32.
    x = jax.random.normal(kx, (2, 4, 8, 16, 16), dtype=jnp.float32)
    out = jax.block_until_ready(layer_tam_se_forward(x, conv1_w, conv2_w))
    assert out.shape == x.shape
    assert jnp.allclose(out, _reference(x, w1, w2), atol=1e-5, rtol=1e-5), "case 1"

    # Case 2: awkward shape (rows=30 not a multiple of 8, h*w=49 < 128), f32.
    x2 = jax.random.normal(kx2, (2, 3, 5, 7, 7), dtype=jnp.float32)
    out2 = jax.block_until_ready(layer_tam_se_forward(x2, conv1_w, conv2_w))
    assert jnp.allclose(out2, _reference(x2, w1, w2), atol=1e-5, rtol=1e-5), "case 2"

    # Case 3: force the large-h*w two-pass fallback with a tiny tile budget
    # (h*w = 1230 is not a multiple of the 256-lane hw tile).
    x3 = jax.random.normal(kx3, (2, 2, 2, 30, 41), dtype=jnp.float32)
    out3 = jax.block_until_ready(
        layer_tam_se_forward(x3, conv1_w, conv2_w, tile_bytes_override=8192))
    assert jnp.allclose(out3, _reference(x3, w1, w2), atol=1e-5, rtol=1e-5), "case 3"

    # Case 4: bf16 activations exercise the f32-gate path (sublane = 16).
    x4 = jax.random.normal(kx4, (2, 4, 6, 14, 14), dtype=jnp.bfloat16)
    out4 = jax.block_until_ready(layer_tam_se_forward(x4, conv1_w, conv2_w))
    ref4 = _reference(x4, w1, w2)
    assert jnp.allclose(out4.astype(jnp.float32), ref4.astype(jnp.float32),
                        atol=5e-2, rtol=5e-2), "case 4"

    print("KERNEL_OK")
</pallas_src>

<mosaic_0001>
module attributes {stable_mosaic.version = 11 : i64} {
  func.func @_se_gate_kernel(%arg0: i32, %arg1: memref<2xf32, #tpu.memory_space<smem>>, %arg2: memref<16x256xf32, #tpu.memory_space<vmem>>, %arg3: memref<16x256xf32, #tpu.memory_space<vmem>>) attributes {dimension_semantics = [#tpu.dimension_semantics<parallel>], iteration_bounds = array<i64: 4>, scalar_prefetch = 1 : i64, scratch_operands = 0 : i64, tpu.core_type = #tpu.core_type<tc>, window_params = [{transform_indices = @transform_0, window_bounds = array<i64: 16, 256>}, {transform_indices = @transform_1, window_bounds = array<i64: 16, 256>}]} {
    %c0 = arith.constant 0 : index
    %c0_0 = arith.constant 0 : index
    %0 = vector.load %arg2[%c0, %c0_0] : memref<16x256xf32, #tpu.memory_space<vmem>>, vector<16x256xf32>
    %cst = arith.constant dense<0.000000e+00> : vector<16xf32>
    %1 = vector.multi_reduction <add>, %0, %cst [1] : vector<16x256xf32> to vector<16xf32>
    %2 = vector.shape_cast %1 : vector<16xf32> to vector<16x1xf32>
    %cst_1 = arith.constant 3.906250e-03 : f32
    %3 = vector.broadcast %cst_1 : f32 to vector<16x1xf32>
    %4 = arith.mulf %2, %3 : vector<16x1xf32>
    %c1 = arith.constant 1 : index
    %5 = memref.load %arg1[%c1] : memref<2xf32, #tpu.memory_space<smem>>
    %c0_2 = arith.constant 0 : index
    %6 = memref.load %arg1[%c0_2] : memref<2xf32, #tpu.memory_space<smem>>
    %7 = vector.broadcast %6 : f32 to vector<16x1xf32>
    %8 = arith.mulf %7, %4 : vector<16x1xf32>
    %cst_3 = arith.constant 0.000000e+00 : f32
    %9 = vector.broadcast %cst_3 : f32 to vector<16x1xf32>
    %10 = arith.maximumf %8, %9 : vector<16x1xf32>
    %11 = vector.broadcast %5 : f32 to vector<16x1xf32>
    %12 = arith.mulf %11, %10 : vector<16x1xf32>
    %13 = arith.negf %12 : vector<16x1xf32>
    %14 = math.exp %13 : vector<16x1xf32>
    %cst_4 = arith.constant 1.000000e+00 : f32
    %15 = vector.broadcast %cst_4 : f32 to vector<16x1xf32>
    %16 = arith.addf %15, %14 : vector<16x1xf32>
    %17 = arith.divf %15, %16 : vector<16x1xf32>
    %cst_5 = arith.constant 5.000000e-01 : f32
    %18 = vector.broadcast %cst_5 : f32 to vector<16x1xf32>
    %19 = arith.subf %17, %18 : vector<16x1xf32>
    %cst_6 = arith.constant 1.000000e+00 : f32
    %20 = vector.broadcast %cst_6 : f32 to vector<16x1xf32>
    %21 = arith.addf %20, %19 : vector<16x1xf32>
    %22 = vector.broadcast %21 : vector<16x1xf32> to vector<16x256xf32>
    %23 = arith.mulf %0, %22 : vector<16x256xf32>
    %c0_7 = arith.constant 0 : index
    %c0_8 = arith.constant 0 : index
    %24 = vector.load %arg3[%c0_7, %c0_8] : memref<16x256xf32, #tpu.memory_space<vmem>>, vector<16x256xf32>
    tpu.vector_store %arg3[%c0_7, %c0_8], %23 {strides = array<i32>} : memref<16x256xf32, #tpu.memory_space<vmem>>, vector<16x256xf32>,
    return
  }
  func.func @transform_0(%arg0: i32, %arg1: memref<2xf32, #tpu.memory_space<smem>>) -> (i32, i32) {
    %c0_i32 = arith.constant 0 : i32
    %c0_i32_0 = arith.constant 0 : i32
    return %arg0, %c0_i32 : i32, i32
  }
  func.func @transform_1(%arg0: i32, %arg1: memref<2xf32, #tpu.memory_space<smem>>) -> (i32, i32) {
    %c0_i32 = arith.constant 0 : i32
    %c0_i32_0 = arith.constant 0 : i32
    return %arg0, %c0_i32 : i32, i32
  }
}

</mosaic_0001>

<llo_original>
// kernel: layer_tam_se_forward.1
$region0: #{layer_tam_se_forward.1}
  #allocation0 [shape = 'u32[]', space=smem, size = 0x4, offset = 0x4, fixed_abs, tag = 'smem constant byte address 0x4 - core index']
  #allocation1 [shape = 'u32[144,128]{1,0:T(1,128)}', space=vmem, size = 0x12000, scoped, tag = 'internal scratch']
  #allocation2 [shape = 's32[1]{0}', space=sflag, size = 0x4, scoped, tag = 'scoped memory for layer_tam_se_forward.1']
  #allocation3 [shape = 'u8[512]{0}', space=smem, size = 0x200, scoped, tag = 'prefetched SMEM operand 0']
  %s0 = inlined_call_operand.vmem [shape: f32[2], index: 0, kind: input, shape index: {}]
  %s1 = inlined_call_operand.vmem [shape: f32[64,256], index: 1, kind: input, shape index: {}]
  %s2 = inlined_call_operand.vmem [shape: f32[64,256], index: 2, kind: output, shape index: {}]
  %s3 = sld [smem:[#allocation0]]
  $region37: #{layer_tam_se_forward.1} parent=0
    _
  %s5 = ssub.s32 1, %s3
  %s6 = scalar_select 0, %s5, %s3
  %s7 = sshll.u32 %s0, 4
  %s8 = int_to_ptr.vmem [resolvable:$true] %s7
  %10 = dma.vmem_to_smem %s8, 16, [#allocation3], [#allocation2]
  %11 = dma.done [#allocation2], 16
  %12 = sfence
  loop: start=0, step=1, limit=6
  $region2: #{layer_tam_se_forward.1} parent=0 // loop_pre_header
    _
  $region3: #{layer_tam_se_forward.1} parent=0 // loop_header
    %s14 = sphi 0, %s18
    %p15 = scmp.ge.s32.totalorder %s14, 6
    %s24 = sphi 0, %s26
    %s27 = sphi 0, %s24
    %s28 = sphi 0, %s27
    %s44 = sphi 0, %s28
    %s50 = sphi 0, %s52
    %s53 = sphi 0, %s50
    %s54 = sphi 0, %s53
    %s70 = sphi 0, %s54
  $region4: #{layer_tam_se_forward.1} parent=0 // loop_header_branch
    %17 = sbr.rel (%p15) target = $region8
  $region5: #{layer_tam_se_forward.1} parent=0 // loop_body
    %s19 = ssub.s32 %s14, 1
    %s20 = ssub.s32 %s14, 2
    %s21 = sadd.s32 %s14, 1
    %s22 = ssub.s32 %s14, %s21
    %p23 = scmp.eq.s32.totalorder %s22, 0
    %s25 = sadd.s32 %s24, 1
    %s26 = scalar_select %p23, %s24, %s25
    %p29 = pneg %p23
    %p30 = scmp.eq.s32.totalorder %s14, 3
    %p31 = por %p29, %p30
    %p32 = scmp.ne.s32.totalorder %s24, %s27
    %p33 = scmp.eq.s32.totalorder %s14, 0
    %p34 = por %p32, %p33
    %p35 = scmp.ne.s32.totalorder %s24, %s27
    %p36 = scmp.eq.s32.totalorder %s19, 3
    %p37 = por %p35, %p36
    %p38 = scmp.ne.s32.totalorder %s27, %s28
    %p39 = scmp.eq.s32.totalorder %s19, 0
    %p40 = por %p38, %p39
    %p41 = scmp.ne.s32.totalorder %s27, %s28
    %p42 = scmp.eq.s32.totalorder %s20, 3
    %p43 = por %p41, %p42
    %p45 = scmp.ne.s32.totalorder %s28, %s44
    %p46 = scmp.eq.s32.totalorder %s20, 0
    %p47 = por %p45, %p46
    %s48 = ssub.s32 %s14, %s21
    %p49 = scmp.eq.s32.totalorder %s48, 0
    %s51 = sadd.s32 %s50, 1
    %s52 = scalar_select %p49, %s50, %s51
    %p55 = pneg %p49
    %p56 = scmp.eq.s32.totalorder %s14, 3
    %p57 = por %p55, %p56
    %p58 = scmp.ne.s32.totalorder %s50, %s53
    %p59 = scmp.eq.s32.totalorder %s14, 0
    %p60 = por %p58, %p59
    %p61 = scmp.ne.s32.totalorder %s50, %s53
    %p62 = scmp.eq.s32.totalorder %s19, 3
    %p63 = por %p61, %p62
    %p64 = scmp.ne.s32.totalorder %s53, %s54
    %p65 = scmp.eq.s32.totalorder %s19, 0
    %p66 = por %p64, %p65
    %p67 = scmp.ne.s32.totalorder %s53, %s54
    %p68 = scmp.eq.s32.totalorder %s20, 3
    %p69 = por %p67, %p68
    %p71 = scmp.ne.s32.totalorder %s54, %s70
    %p72 = scmp.eq.s32.totalorder %s20, 0
    %p73 = por %p71, %p72
    %p74 = scmp.le.s32.totalorder 1, %s14
    %p75 = scmp.lt.s32.totalorder %s14, 5
    %p76 = pnand %p74, %p75
    %p77 = pneg %p76
    // Predicated region
    $region9: #{layer_tam_se_forward.1} parent=5 // pred_check
      _
    $region10: #{layer_tam_se_forward.1} parent=5 // pred_check_branch
      %79 = sbr.rel (%p76) target = $region12
    $region11: #{layer_tam_se_forward.1} parent=5 // pred_region
      %s80 = ssub.s32 %s14, 1
    $region12: #{layer_tam_se_forward.1} parent=5 // pred_fallthru
      _
    %p81 = scmp.lt.s32.totalorder %s14, 4
    // Predicated region
    $region13: #{layer_tam_se_forward.1} parent=5 // pred_check
      %p82 = pneg %p81
    $region14: #{layer_tam_se_forward.1} parent=5 // pred_check_branch
      %84 = sbr.rel (%p82) target = $region16
    $region15: #{layer_tam_se_forward.1} parent=5 // pred_region
      // Predicated region
      $region17: #{layer_tam_se_forward.1} parent=15 // pred_check
        %p85 = pneg %p34
      $region18: #{layer_tam_se_forward.1} parent=15 // pred_check_branch
        %87 = sbr.rel (%p85) target = $region20
      $region19: #{layer_tam_se_forward.1} parent=15 // pred_region
        %s88 = smul.u32 2, %s14
        %p89 = scmp.lt.s32.totalorder %s88, 7
        %s90 = scalar_select %p89, %s88, 7
        %s91 = smul.addr %s90, 2
        %s92 = smul.addr %s91, 8
        %s93 = scalar_lea.vmem %s1, %s92
        %s94 = smul.u32 2, %s14
      $region20: #{layer_tam_se_forward.1} parent=15 // pred_fallthru
        _
    $region16: #{layer_tam_se_forward.1} parent=5 // pred_fallthru
      _
    %p95 = scmp.le.s32.totalorder 1, %s14
    %p96 = scmp.lt.s32.totalorder %s14, 5
    %p97 = pnand %p95, %p96
    %p98 = pneg %p97
    // Predicated region
    $region21: #{layer_tam_se_forward.1} parent=5 // pred_check
      _
    $region22: #{layer_tam_se_forward.1} parent=5 // pred_check_branch
      %100 = sbr.rel (%p97) target = $region24
    $region23: #{layer_tam_se_forward.1} parent=5 // pred_region
      %s101 = ssub.s32 %s14, 1
      %s102 = smul.u32 2, %s19
      %p103 = scmp.lt.s32.totalorder %s102, 7
      %s104 = scalar_select %p103, %s102, 7
      %s105 = smul.addr %s104, 2
      %s106 = smul.addr %s105, 8
      %s107 = scalar_lea.vmem %s1, %s106
      %p108 = pneg %p40
      %p109 = pneg %p37
      %p110 = pneg %p66
      %p111 = pneg %p63
      %s112 = smul.u32 2, %s19
      %p113 = scmp.lt.s32.totalorder %s112, 7
      %s114 = scalar_select %p113, %s112, 7
      %s115 = smul.addr %s114, 2
      %s116 = smul.addr %s115, 8
      %s117 = scalar_lea.vmem %s2, %s116
      %s118 = smul.u32 2, %s19
      %p119 = scmp.lt.s32.totalorder %s118, 7
      %s120 = scalar_select %p119, %s118, 7
      %s121 = smul.addr %s120, 2
      %s122 = smul.addr %s121, 8
      %s123 = scalar_lea.vmem %s1, %s122
      %s124 = smul.u32 2, %s19
      %s125 = smul.u32 2, %s19
      %p126 = scmp.lt.s32.totalorder %s125, 7
      %s127 = scalar_select %p126, %s125, 7
      %s128 = smul.addr %s127, 2
      %s129 = smul.addr %s128, 8
      %s130 = scalar_lea.vmem %s2, %s129
      %s131 = smul.u32 2, %s19
      %v132 = vld [vmem:[%s123] sm:$0xff]
      %v133 = vld [vmem:[%s123 + $0x8] sm:$0xff]
      %v134 = vld [vmem:[%s123 + $0x10] sm:$0xff]
      %v135 = vld [vmem:[%s123 + $0x18] sm:$0xff]
      %v136 = vadd.f32 %v132, %v133
      %137 = vadd.xlane.f32.xlu0 %v136
      %v138 = vpop.xlane.xlu0 %137
      %v139 = vadd.f32 %v134, %v135
      %140 = vadd.xlane.f32.xlu0 %v139
      %v141 = vpop.xlane.xlu0 %140
      %v142 = vmul.f32 %v138, 0.00390625
      %v143 = vmul.f32 %v141, 0.00390625
      %s144 = sld [smem:[#allocation3 + $0x1]]
      %s145 = sld [smem:[#allocation3]]
      %v146 = vstv %s145
      %v147 = vmul.f32 %v146, %v142
      %v148 = vmul.f32 %v146, %v143
      %v149 = vmax.f32 %v147, 0.0
      %v150 = vmax.f32 %v148, 0.0
      %v151 = vstv %s144
      %v152 = vmul.f32 %v151, %v149
      %v153 = vmul.f32 %v151, %v150
      %v154 = vxor.u32 %v152, 2147483648
      %v155 = vxor.u32 %v153, 2147483648
      %v156 = vmul.f32 %v154, 1.442695
      %v157 = vpow.pop %v156
      %v158 = vmul.f32 %v155, 1.442695
      %v159 = vpow.pop %v158
      %v160 = vadd.f32 %v157, 1.0
      %v161 = vadd.f32 %v159, 1.0
      %v162 = vrcp.pop %v160
      %v163 = vmul.f32 1.0, %v162
      %v164 = vrcp.pop %v161
      %v165 = vmul.f32 1.0, %v164
      %v166 = vsub.f32 %v163, 0.5
      %v167 = vsub.f32 %v165, 0.5
      %v168 = vadd.f32 %v166, 1.0
      %v169 = vadd.f32 %v167, 1.0
      %v170 = vmul.f32 %v132, %v168
      %v171 = vmul.f32 %v133, %v168
      %v172 = vmul.f32 %v134, %v169
      %v173 = vmul.f32 %v135, %v169
      %174 = vst [vmem:[%s130] sm:$0xff] %v170
      %175 = vst [vmem:[%s130 + $0x8] sm:$0xff] %v171
      %176 = vst [vmem:[%s130 + $0x10] sm:$0xff] %v172
      %177 = vst [vmem:[%s130 + $0x18] sm:$0xff] %v173
      %s178 = smul.u32 2, %s19
      %p179 = scmp.lt.s32.totalorder %s178, 7
      %s180 = scalar_select %p179, %s178, 7
      %s181 = smul.addr %s180, 2
      %s182 = smul.addr %s181, 8
      %s183 = scalar_lea.vmem %s2, %s182
      // Predicated region
      $region25: #{layer_tam_se_forward.1} parent=23 // pred_check
        %p184 = pneg %p63
      $region26: #{layer_tam_se_forward.1} parent=23 // pred_check_branch
        %186 = sbr.rel (%p184) target = $region28
      $region27: #{layer_tam_se_forward.1} parent=23 // pred_region
        %s187 = smul.u32 2, %s19
      $region28: #{layer_tam_se_forward.1} parent=23 // pred_fallthru
        _
    $region24: #{layer_tam_se_forward.1} parent=5 // pred_fallthru
      _
    %p188 = scmp.le.s32.totalorder 2, %s14
    // Predicated region
    $region29: #{layer_tam_se_forward.1} parent=5 // pred_check
      %p189 = pneg %p188
    $region30: #{layer_tam_se_forward.1} parent=5 // pred_check_branch
      %191 = sbr.rel (%p189) target = $region32
    $region31: #{layer_tam_se_forward.1} parent=5 // pred_region
      %s192 = ssub.s32 %s14, 2
      // Predicated region
      $region33: #{layer_tam_se_forward.1} parent=31 // pred_check
        %p193 = pneg %p69
      $region34: #{layer_tam_se_forward.1} parent=31 // pred_check_branch
        %195 = sbr.rel (%p193) target = $region36
      $region35: #{layer_tam_se_forward.1} parent=31 // pred_region
        %s196 = smul.u32 2, %s20
        %p197 = scmp.lt.s32.totalorder %s196, 7
        %s198 = scalar_select %p197, %s196, 7
        %s199 = smul.addr %s198, 2
        %s200 = smul.addr %s199, 8
        %s201 = scalar_lea.vmem %s2, %s200
      $region36: #{layer_tam_se_forward.1} parent=31 // pred_fallthru
        _
    $region32: #{layer_tam_se_forward.1} parent=5 // pred_fallthru
      _
  $region6: #{layer_tam_se_forward.1} parent=0 // loop_footer
    %s18 = sadd.s32 1, %s14
  $region7: #{layer_tam_se_forward.1} parent=0 // loop_footer_branch
    %13 = sbr.rel target = $region3
  $region8: #{layer_tam_se_forward.1} parent=0 // loop_exit
    _

</llo_original>
